<compile_context>
chip_gen: v7x
topology: tpu7x:2x2x1
jax: 0.10.0
libtpu: 0.0.40
codegen_flags: <defaults>
</compile_context>

<pallas_src>
import functools

import jax
import jax.numpy as jnp
from jax.experimental import pallas as pl
from jax.experimental.pallas import tpu as pltpu

HIDDEN = 128     # hidden width of the PyTorch module
LANE = 128       # TPU lane width
SUBLANE = 8      # f32 sublane count


def _round_up(n, m):
    return ((n + m - 1) // m) * m


# ----------------------------------------------------------------------------
# Kernel
# ----------------------------------------------------------------------------
def _make_kernel(b_real, out_real, inv_count):
    """Single-block DuelingDQN forward. b_real/out_real/inv_count are static."""

    def kernel(x_ref,
               w1_ref, b1_ref,          # feature layer 1: (Kp,128), (1,128)
               w2_ref, b2_ref,          # feature layer 2: (128,128), (1,128)
               wva1_ref, bva1_ref,      # fused value|adv layer 1: (128,256), (1,256)
               wv2_ref, bv2_ref,        # value head, lane-tiled: (128,128), (1,128)
               wa2_ref, ba2_ref,        # adv head, lane-padded:  (128,128), (1,128)
               out_ref):                # (Bp, 128)
        w_dtype = w1_ref.dtype
        x = x_ref[...]                                   # (Bp, Kp), zero-padded

        # feature_layer: Linear -> ReLU -> Linear -> ReLU
        h = jnp.dot(x, w1_ref[...], preferred_element_type=jnp.float32) + b1_ref[...]
        h = jnp.maximum(h, 0.0).astype(w_dtype)
        h = jnp.dot(h, w2_ref[...], preferred_element_type=jnp.float32) + b2_ref[...]
        h = jnp.maximum(h, 0.0).astype(w_dtype)          # (Bp, 128)

        # Fused first layer of both streams: one 128 -> 256 matmul.
        hva = jnp.dot(h, wva1_ref[...], preferred_element_type=jnp.float32) + bva1_ref[...]
        hva = jnp.maximum(hva, 0.0).astype(w_dtype)      # (Bp, 256)
        hv = hva[:, :HIDDEN]                             # value hidden   (Bp, 128)
        ha = hva[:, HIDDEN:]                             # adv hidden     (Bp, 128)

        # Value head: wv2 (128->1) tiled across all 128 lanes, so every output
        # column already equals the scalar state value (lane-dense, no bcast).
        v = jnp.dot(hv, wv2_ref[...], preferred_element_type=jnp.float32) + bv2_ref[...]

        # Advantage head: wa2/ba2 zero-padded from out_real to 128 lanes.
        a = jnp.dot(ha, wa2_ref[...], preferred_element_type=jnp.float32) + ba2_ref[...]

        # torch's advantages.mean() is a GLOBAL mean over (B, output_dim).
        # Padded rows/cols hold bias garbage, so mask them out of the sum and
        # scale by the precomputed 1/(B*output_dim).
        rows = jax.lax.broadcasted_iota(jnp.int32, a.shape, 0)
        cols = jax.lax.broadcasted_iota(jnp.int32, a.shape, 1)
        valid = (rows < b_real) & (cols < out_real)
        a_mean = jnp.sum(jnp.where(valid, a, 0.0)) * inv_count

        # qvals = values + (advantages - mean)  — full 128-lane unmasked store.
        out_ref[...] = v + (a - a_mean)

    return kernel


# ----------------------------------------------------------------------------
# One-time parameter packing (pad / fuse / tile into TPU-friendly layout)
# ----------------------------------------------------------------------------
def pack_params(params, input_dim, output_dim, dtype=jnp.float32):
    """dtype=jnp.bfloat16 recommended on v6e/v7x (accumulation stays f32)."""
    kp = _round_up(input_dim, LANE)

    w1 = jnp.zeros((kp, HIDDEN), dtype).at[:input_dim, :].set(params["w1"].astype(dtype))
    b1 = params["b1"].astype(dtype)
    w2 = params["w2"].astype(dtype)
    b2 = params["b2"].astype(dtype)

    # Fuse value/advantage first layers into one [128, 256] weight.
    wva1 = jnp.concatenate([params["wv1"], params["wa1"]], axis=1).astype(dtype)
    bva1 = jnp.concatenate([params["bv1"], params["ba1"]], axis=1).astype(dtype)

    # Value head: tile the single output column across all 128 lanes.
    wv2 = jnp.tile(params["wv2"], (1, LANE)).astype(dtype)
    bv2 = jnp.tile(params["bv2"], (1, LANE)).astype(dtype)

    # Advantage head: zero-pad output_dim -> 128 lanes.
    wa2 = jnp.zeros((HIDDEN, LANE), dtype).at[:, :output_dim].set(params["wa2"].astype(dtype))
    ba2 = jnp.zeros((1, LANE), dtype).at[:, :output_dim].set(params["ba2"].astype(dtype))

    return dict(w1=w1, b1=b1, w2=w2, b2=b2, wva1=wva1, bva1=bva1,
                wv2=wv2, bv2=bv2, wa2=wa2, ba2=ba2)


# ----------------------------------------------------------------------------
# Forward wrapper
# ----------------------------------------------------------------------------
@functools.partial(jax.jit, static_argnames=("output_dim",))
def dueling_dqn_forward(x, packed, *, output_dim):
    B, input_dim = x.shape
    bp = _round_up(max(B, SUBLANE), SUBLANE)     # pad batch to >= 8, multiple of 8
    kp = packed["w1"].shape[0]                   # padded contraction dim (>=128)
    w_dtype = packed["w1"].dtype

    # Zero-pad x: extra K columns contribute nothing to the matmul; extra batch
    # rows are masked out of the global mean inside the kernel.
    xp = jnp.zeros((bp, kp), w_dtype).at[:B, :input_dim].set(x.astype(w_dtype))

    kernel = _make_kernel(B, output_dim, 1.0 / float(B * output_dim))

    args = (xp,
            packed["w1"], packed["b1"],
            packed["w2"], packed["b2"],
            packed["wva1"], packed["bva1"],
            packed["wv2"], packed["bv2"],
            packed["wa2"], packed["ba2"])

    vmem = pl.BlockSpec(memory_space=pltpu.VMEM)
    out = pl.pallas_call(
        kernel,
        out_shape=jax.ShapeDtypeStruct((bp, LANE), jnp.float32),
        in_specs=[vmem] * len(args),
        out_specs=vmem,
    )(*args)
    return out[:B, :output_dim]


# ----------------------------------------------------------------------------
# Synthetic init + pure-JAX reference (mirrors the PyTorch module)
# ----------------------------------------------------------------------------
def init_params(key, input_dim, output_dim, hidden=HIDDEN):
    ks = jax.random.split(key, 12)

    def lin(kw, kb, fan_in, fan_out):
        bound = 1.0 / jnp.sqrt(jnp.float32(fan_in))
        w = jax.random.uniform(kw, (fan_in, fan_out), jnp.float32, -bound, bound)
        b = jax.random.uniform(kb, (1, fan_out), jnp.float32, -bound, bound)
        return w, b

    w1, b1 = lin(ks[0], ks[1], input_dim, hidden)
    w2, b2 = lin(ks[2], ks[3], hidden, hidden)
    wv1, bv1 = lin(ks[4], ks[5], hidden, hidden)
    wv2, bv2 = lin(ks[6], ks[7], hidden, 1)
    wa1, ba1 = lin(ks[8], ks[9], hidden, hidden)
    wa2, ba2 = lin(ks[10], ks[11], hidden, output_dim)
    return dict(w1=w1, b1=b1, w2=w2, b2=b2,
                wv1=wv1, bv1=bv1, wv2=wv2, bv2=bv2,
                wa1=wa1, ba1=ba1, wa2=wa2, ba2=ba2)


def reference_forward(x, p):
    h = jax.nn.relu(x @ p["w1"] + p["b1"])
    h = jax.nn.relu(h @ p["w2"] + p["b2"])
    v = jax.nn.relu(h @ p["wv1"] + p["bv1"]) @ p["wv2"] + p["bv2"]
    a = jax.nn.relu(h @ p["wa1"] + p["ba1"]) @ p["wa2"] + p["ba2"]
    return v + (a - jnp.mean(a))


# TODO(synk): save_model / DuelingDQN.save are file-I/O utilities with no
# kernel equivalent; only the forward pass is implemented here.

if __name__ == "__main__":
    key = jax.random.PRNGKey(0)
    k_x, k_x2, k_p = jax.random.split(key, 3)

    input_dim = 16
    output_dim = 8
    params = init_params(k_p, input_dim, output_dim)
    packed = pack_params(params, input_dim, output_dim, dtype=jnp.float32)

    # Case 1: tiny batch (matches the original spec's scale).
    x = jax.random.normal(k_x, (2, input_dim), jnp.float32)
    q = jax.block_until_ready(dueling_dqn_forward(x, packed, output_dim=output_dim))
    q_ref = reference_forward(x, params)
    assert q.shape == (2, output_dim)
    assert jnp.allclose(q, q_ref, atol=2e-5, rtol=2e-5), "mismatch vs reference (B=2)"

    # Case 2: batch not a multiple of 8, exercises padding + masked global mean.
    x2 = jax.random.normal(k_x2, (5, input_dim), jnp.float32)
    q2 = jax.block_until_ready(dueling_dqn_forward(x2, packed, output_dim=output_dim))
    q2_ref = reference_forward(x2, params)
    assert q2.shape == (5, output_dim)
    assert jnp.allclose(q2, q2_ref, atol=2e-5, rtol=2e-5), "mismatch vs reference (B=5)"

    print("KERNEL_OK")
</pallas_src>

<mosaic_0001>
module attributes {stable_mosaic.version = 11 : i64} {
  func.func @kernel(%arg0: memref<8x128xf32, #tpu.memory_space<vmem>>, %arg1: memref<128x128xf32, #tpu.memory_space<vmem>>, %arg2: memref<1x128xf32, #tpu.memory_space<vmem>>, %arg3: memref<128x128xf32, #tpu.memory_space<vmem>>, %arg4: memref<1x128xf32, #tpu.memory_space<vmem>>, %arg5: memref<128x256xf32, #tpu.memory_space<vmem>>, %arg6: memref<1x256xf32, #tpu.memory_space<vmem>>, %arg7: memref<128x128xf32, #tpu.memory_space<vmem>>, %arg8: memref<1x128xf32, #tpu.memory_space<vmem>>, %arg9: memref<128x128xf32, #tpu.memory_space<vmem>>, %arg10: memref<1x128xf32, #tpu.memory_space<vmem>>, %arg11: memref<8x128xf32, #tpu.memory_space<vmem>>) attributes {dimension_semantics = [], scalar_prefetch = 0 : i64, scratch_operands = 0 : i64, tpu.core_type = #tpu.core_type<tc>} {
    %c0 = arith.constant 0 : index
    %c0_0 = arith.constant 0 : index
    %0 = vector.load %arg0[%c0, %c0_0] : memref<8x128xf32, #tpu.memory_space<vmem>>, vector<8x128xf32>
    %c0_1 = arith.constant 0 : index
    %c0_2 = arith.constant 0 : index
    %1 = vector.load %arg1[%c0_1, %c0_2] : memref<128x128xf32, #tpu.memory_space<vmem>>, vector<128x128xf32>
    %cst = arith.constant dense<0.000000e+00> : vector<8x128xf32>
    %2 = tpu.matmul %0, %1, %cst {dimension_numbers = #tpu.dot_dimension_numbers<[1], [0], [0], [1], [0, 0, 1, 1], [], []>} : vector<8x128xf32>, vector<128x128xf32>, vector<8x128xf32> -> vector<8x128xf32>
    %c0_3 = arith.constant 0 : index
    %c0_4 = arith.constant 0 : index
    %3 = vector.load %arg2[%c0_3, %c0_4] : memref<1x128xf32, #tpu.memory_space<vmem>>, vector<1x128xf32>
    %4 = vector.broadcast %3 : vector<1x128xf32> to vector<8x128xf32>
    %5 = arith.addf %2, %4 : vector<8x128xf32>
    %cst_5 = arith.constant 0.000000e+00 : f32
    %6 = vector.broadcast %cst_5 : f32 to vector<8x128xf32>
    %7 = arith.maximumf %5, %6 : vector<8x128xf32>
    %c0_6 = arith.constant 0 : index
    %c0_7 = arith.constant 0 : index
    %8 = vector.load %arg3[%c0_6, %c0_7] : memref<128x128xf32, #tpu.memory_space<vmem>>, vector<128x128xf32>
    %cst_8 = arith.constant dense<0.000000e+00> : vector<8x128xf32>
    %9 = tpu.matmul %7, %8, %cst_8 {dimension_numbers = #tpu.dot_dimension_numbers<[1], [0], [0], [1], [0, 0, 1, 1], [], []>} : vector<8x128xf32>, vector<128x128xf32>, vector<8x128xf32> -> vector<8x128xf32>
    %c0_9 = arith.constant 0 : index
    %c0_10 = arith.constant 0 : index
    %10 = vector.load %arg4[%c0_9, %c0_10] : memref<1x128xf32, #tpu.memory_space<vmem>>, vector<1x128xf32>
    %11 = vector.broadcast %10 : vector<1x128xf32> to vector<8x128xf32>
    %12 = arith.addf %9, %11 : vector<8x128xf32>
    %cst_11 = arith.constant 0.000000e+00 : f32
    %13 = vector.broadcast %cst_11 : f32 to vector<8x128xf32>
    %14 = arith.maximumf %12, %13 : vector<8x128xf32>
    %c0_12 = arith.constant 0 : index
    %c0_13 = arith.constant 0 : index
    %15 = vector.load %arg5[%c0_12, %c0_13] : memref<128x256xf32, #tpu.memory_space<vmem>>, vector<128x256xf32>
    %cst_14 = arith.constant dense<0.000000e+00> : vector<8x256xf32>
    %16 = tpu.matmul %14, %15, %cst_14 {dimension_numbers = #tpu.dot_dimension_numbers<[1], [0], [0], [1], [0, 0, 1, 1], [], []>} : vector<8x128xf32>, vector<128x256xf32>, vector<8x256xf32> -> vector<8x256xf32>
    %c0_15 = arith.constant 0 : index
    %c0_16 = arith.constant 0 : index
    %17 = vector.load %arg6[%c0_15, %c0_16] : memref<1x256xf32, #tpu.memory_space<vmem>>, vector<1x256xf32>
    %18 = vector.broadcast %17 : vector<1x256xf32> to vector<8x256xf32>
    %19 = arith.addf %16, %18 : vector<8x256xf32>
    %cst_17 = arith.constant 0.000000e+00 : f32
    %20 = vector.broadcast %cst_17 : f32 to vector<8x256xf32>
    %21 = arith.maximumf %19, %20 : vector<8x256xf32>
    %22 = vector.extract_strided_slice %21 {offsets = [0, 0], sizes = [8, 128], strides = [1, 1]} : vector<8x256xf32> to vector<8x128xf32>
    %23 = vector.extract_strided_slice %21 {offsets = [0, 128], sizes = [8, 128], strides = [1, 1]} : vector<8x256xf32> to vector<8x128xf32>
    %c0_18 = arith.constant 0 : index
    %c0_19 = arith.constant 0 : index
    %24 = vector.load %arg7[%c0_18, %c0_19] : memref<128x128xf32, #tpu.memory_space<vmem>>, vector<128x128xf32>
    %cst_20 = arith.constant dense<0.000000e+00> : vector<8x128xf32>
    %25 = tpu.matmul %22, %24, %cst_20 {dimension_numbers = #tpu.dot_dimension_numbers<[1], [0], [0], [1], [0, 0, 1, 1], [], []>} : vector<8x128xf32>, vector<128x128xf32>, vector<8x128xf32> -> vector<8x128xf32>
    %c0_21 = arith.constant 0 : index
    %c0_22 = arith.constant 0 : index
    %26 = vector.load %arg8[%c0_21, %c0_22] : memref<1x128xf32, #tpu.memory_space<vmem>>, vector<1x128xf32>
    %27 = vector.broadcast %26 : vector<1x128xf32> to vector<8x128xf32>
    %28 = arith.addf %25, %27 : vector<8x128xf32>
    %c0_23 = arith.constant 0 : index
    %c0_24 = arith.constant 0 : index
    %29 = vector.load %arg9[%c0_23, %c0_24] : memref<128x128xf32, #tpu.memory_space<vmem>>, vector<128x128xf32>
    %cst_25 = arith.constant dense<0.000000e+00> : vector<8x128xf32>
    %30 = tpu.matmul %23, %29, %cst_25 {dimension_numbers = #tpu.dot_dimension_numbers<[1], [0], [0], [1], [0, 0, 1, 1], [], []>} : vector<8x128xf32>, vector<128x128xf32>, vector<8x128xf32> -> vector<8x128xf32>
    %c0_26 = arith.constant 0 : index
    %c0_27 = arith.constant 0 : index
    %31 = vector.load %arg10[%c0_26, %c0_27] : memref<1x128xf32, #tpu.memory_space<vmem>>, vector<1x128xf32>
    %32 = vector.broadcast %31 : vector<1x128xf32> to vector<8x128xf32>
    %33 = arith.addf %30, %32 : vector<8x128xf32>
    %34 = tpu.iota {dimensions = array<i32: 0>} : vector<8x128xi32>
    %35 = tpu.iota {dimensions = array<i32: 1>} : vector<8x128xi32>
    %c2_i32 = arith.constant 2 : i32
    %36 = vector.broadcast %c2_i32 : i32 to vector<8x128xi32>
    %37 = arith.cmpi slt, %34, %36 : vector<8x128xi32>
    %c8_i32 = arith.constant 8 : i32
    %38 = vector.broadcast %c8_i32 : i32 to vector<8x128xi32>
    %39 = arith.cmpi slt, %35, %38 : vector<8x128xi32>
    %40 = arith.andi %37, %39 : vector<8x128xi1>
    %cst_28 = arith.constant 0.000000e+00 : f32
    %41 = vector.broadcast %cst_28 : f32 to vector<8x128xf32>
    %42 = arith.select %40, %33, %41 : vector<8x128xi1>, vector<8x128xf32>
    %43 = vector.shape_cast %42 : vector<8x128xf32> to vector<1x8x128xf32>
    %cst_29 = arith.constant dense<0.000000e+00> : vector<1xf32>
    %44 = vector.multi_reduction <add>, %43, %cst_29 [1, 2] : vector<1x8x128xf32> to vector<1xf32>
    %45 = vector.shape_cast %44 : vector<1xf32> to vector<1x1x1xf32>
    %46 = vector.extract %45[0, 0, 0] : f32 from vector<1x1x1xf32>
    %cst_30 = arith.constant 6.250000e-02 : f32
    %47 = arith.mulf %46, %cst_30 : f32
    %48 = vector.broadcast %47 : f32 to vector<8x128xf32>
    %49 = arith.subf %33, %48 : vector<8x128xf32>
    %50 = arith.addf %28, %49 : vector<8x128xf32>
    %c0_31 = arith.constant 0 : index
    %c0_32 = arith.constant 0 : index
    %51 = vector.load %arg11[%c0_31, %c0_32] : memref<8x128xf32, #tpu.memory_space<vmem>>, vector<8x128xf32>
    tpu.vector_store %arg11[%c0_31, %c0_32], %50 {strides = array<i32>} : memref<8x128xf32, #tpu.memory_space<vmem>>, vector<8x128xf32>,
    return
  }
}

</mosaic_0001>

<llo_original>
// kernel: dueling_dqn_forward.1
$region0: #{dueling_dqn_forward.1}
  #allocation0 [shape = 'u32[]', space=smem, size = 0x4, offset = 0x4, fixed_abs, tag = 'smem constant byte address 0x4 - core index']
  #allocation1 [shape = 'u32[144,128]{1,0:T(1,128)}', space=vmem, size = 0x12000, scoped, tag = 'internal scratch']
  %s0 = inlined_call_operand.vmem [shape: f32[8,128], index: 0, kind: input, shape index: {}]
  %s1 = inlined_call_operand.hbm [shape: f32[128,128], index: 1, kind: input, shape index: {}]
  %s2 = inlined_call_operand.vmem [shape: f32[1,128], index: 2, kind: input, shape index: {}]
  %s3 = inlined_call_operand.hbm [shape: f32[128,128], index: 3, kind: input, shape index: {}]
  %s4 = inlined_call_operand.vmem [shape: f32[1,128], index: 4, kind: input, shape index: {}]
  %s5 = inlined_call_operand.hbm [shape: f32[128,256], index: 5, kind: input, shape index: {}]
  %s6 = inlined_call_operand.vmem [shape: f32[1,256], index: 6, kind: input, shape index: {}]
  %s7 = inlined_call_operand.hbm [shape: f32[128,128], index: 7, kind: input, shape index: {}]
  %s8 = inlined_call_operand.vmem [shape: f32[1,128], index: 8, kind: input, shape index: {}]
  %s9 = inlined_call_operand.hbm [shape: f32[128,128], index: 9, kind: input, shape index: {}]
  %s10 = inlined_call_operand.vmem [shape: f32[1,128], index: 10, kind: input, shape index: {}]
  %s11 = inlined_call_operand.vmem [shape: f32[8,128], index: 11, kind: output, shape index: {}]
  %s12 = sld [smem:[#allocation0]]
  $region74: #{dueling_dqn_forward.1} parent=0
    _
  %s14 = ssub.s32 1, %s12
  %s15 = scalar_select 0, %s14, %s12
  $region1: #{dueling_dqn_forward.1} parent=0
    #allocation2 [shape = 'u8[65536]{0}', space=vmem, size = 0x10000, scoped, tag = 'input window, operand 1, single buffered']
    #allocation3 [shape = 's32[1]{0}', space=sflag, size = 0x4, scoped, tag = 'scoped memory for dueling_dqn_forward.1']
    #allocation4 [shape = 'u8[65536]{0}', space=vmem, size = 0x10000, scoped, tag = 'input window, operand 3, single buffered']
    #allocation5 [shape = 's32[1]{0}', space=sflag, size = 0x4, scoped, tag = 'scoped memory for dueling_dqn_forward.1']
    #allocation6 [shape = 'u8[131072]{0}', space=vmem, size = 0x20000, scoped, tag = 'input window, operand 5, single buffered']
    #allocation7 [shape = 'u8[65536]{0}', space=vmem, size = 0x10000, scoped, tag = 'input window, operand 7, single buffered']
    #allocation8 [shape = 's32[1]{0}', space=sflag, size = 0x4, scoped, tag = 'scoped memory for dueling_dqn_forward.1']
    #allocation9 [shape = 'u8[65536]{0}', space=vmem, size = 0x10000, scoped, tag = 'input window, operand 9, single buffered']
    %16 = vsyncpa [#allocation3], 0
    %17 = vsyncpa [#allocation5], 0
    %18 = vsyncpa [#allocation8], 0
    // Predicated region
    $region2: #{dueling_dqn_forward.1} parent=1 // pred_check
      _
    $region3: #{dueling_dqn_forward.1} parent=1 // pred_check_branch
      %20 = sbr.rel (0) target = $region5
    $region4: #{dueling_dqn_forward.1} parent=1 // pred_region
      _
    $region5: #{dueling_dqn_forward.1} parent=1 // pred_fallthru
      _
    // Predicated region
    $region6: #{dueling_dqn_forward.1} parent=1 // pred_check
      _
    $region7: #{dueling_dqn_forward.1} parent=1 // pred_check_branch
      %22 = sbr.rel (0) target = $region9
    $region8: #{dueling_dqn_forward.1} parent=1 // pred_region
      %s24 = ssub.s32 2048, 2048
      %25 = vsyncadd [#allocation3], %s24
      %s26 = sshll.u32 [#allocation2], 4
      %s27 = int_to_ptr.vmem [resolvable:$true] %s26
      %32 = dma.hbm_to_vmem [thread:$0]  %s1, 2048, %s27, [#allocation3], 128, 128, 8
    $region9: #{dueling_dqn_forward.1} parent=1 // pred_fallthru
      _
    // Predicated region
    $region10: #{dueling_dqn_forward.1} parent=1 // pred_check
      _
    $region11: #{dueling_dqn_forward.1} parent=1 // pred_check_branch
      %34 = sbr.rel (0) target = $region13
    $region12: #{dueling_dqn_forward.1} parent=1 // pred_region
      _
    $region13: #{dueling_dqn_forward.1} parent=1 // pred_fallthru
      _
    // Predicated region
    $region14: #{dueling_dqn_forward.1} parent=1 // pred_check
      _
    $region15: #{dueling_dqn_forward.1} parent=1 // pred_check_branch
      %36 = sbr.rel (0) target = $region17
    $region16: #{dueling_dqn_forward.1} parent=1 // pred_region
      %s38 = ssub.s32 2048, 2048
      %39 = vsyncadd [#allocation5], %s38
      %s40 = sshll.u32 [#allocation4], 4
      %s41 = int_to_ptr.vmem [resolvable:$true] %s40
      %46 = dma.hbm_to_vmem [thread:$0]  %s3, 2048, %s41, [#allocation5], 128, 128, 8
    $region17: #{dueling_dqn_forward.1} parent=1 // pred_fallthru
      _
    // Predicated region
    $region18: #{dueling_dqn_forward.1} parent=1 // pred_check
      _
    $region19: #{dueling_dqn_forward.1} parent=1 // pred_check_branch
      %48 = sbr.rel (0) target = $region21
    $region20: #{dueling_dqn_forward.1} parent=1 // pred_region
      _
    $region21: #{dueling_dqn_forward.1} parent=1 // pred_fallthru
      _
    // Predicated region
    $region22: #{dueling_dqn_forward.1} parent=1 // pred_check
      _
    $region23: #{dueling_dqn_forward.1} parent=1 // pred_check_branch
      %50 = sbr.rel (0) target = $region25
    $region24: #{dueling_dqn_forward.1} parent=1 // pred_region
      %s52 = ssub.s32 4096, 4096
      %53 = vsyncadd [#allocation5], %s52
      %s54 = sshll.u32 [#allocation6], 4
      %s55 = int_to_ptr.vmem [resolvable:$true] %s54
      %60 = dma.hbm_to_vmem [thread:$0]  %s5, 4096, %s55, [#allocation5], 256, 256, 16
    $region25: #{dueling_dqn_forward.1} parent=1 // pred_fallthru
      _
    // Predicated region
    $region26: #{dueling_dqn_forward.1} parent=1 // pred_check
      _
    $region27: #{dueling_dqn_forward.1} parent=1 // pred_check_branch
      %62 = sbr.rel (0) target = $region29
    $region28: #{dueling_dqn_forward.1} parent=1 // pred_region
      _
    $region29: #{dueling_dqn_forward.1} parent=1 // pred_fallthru
      _
    // Predicated region
    $region30: #{dueling_dqn_forward.1} parent=1 // pred_check
      _
    $region31: #{dueling_dqn_forward.1} parent=1 // pred_check_branch
      %64 = sbr.rel (0) target = $region33
    $region32: #{dueling_dqn_forward.1} parent=1 // pred_region
      %s66 = ssub.s32 2048, 2048
      %67 = vsyncadd [#allocation8], %s66
      %s68 = sshll.u32 [#allocation7], 4
      %s69 = int_to_ptr.vmem [resolvable:$true] %s68
      %74 = dma.hbm_to_vmem [thread:$0]  %s7, 2048, %s69, [#allocation8], 128, 128, 8
    $region33: #{dueling_dqn_forward.1} parent=1 // pred_fallthru
      _
    // Predicated region
    $region34: #{dueling_dqn_forward.1} parent=1 // pred_check
      _
    $region35: #{dueling_dqn_forward.1} parent=1 // pred_check_branch
      %76 = sbr.rel (0) target = $region37
    $region36: #{dueling_dqn_forward.1} parent=1 // pred_region
      _
    $region37: #{dueling_dqn_forward.1} parent=1 // pred_fallthru
      _
    // Predicated region
    $region38: #{dueling_dqn_forward.1} parent=1 // pred_check
      _
    $region39: #{dueling_dqn_forward.1} parent=1 // pred_check_branch
      %78 = sbr.rel (0) target = $region41
    $region40: #{dueling_dqn_forward.1} parent=1 // pred_region
      %s80 = ssub.s32 2048, 2048
      %81 = vsyncadd [#allocation8], %s80
      %s82 = sshll.u32 [#allocation9], 4
      %s83 = int_to_ptr.vmem [resolvable:$true] %s82
      %88 = dma.hbm_to_vmem [thread:$0]  %s9, 2048, %s83, [#allocation8], 128, 128, 8
    $region41: #{dueling_dqn_forward.1} parent=1 // pred_fallthru
      _
    // Predicated region
    $region42: #{dueling_dqn_forward.1} parent=1 // pred_check
      _
    $region43: #{dueling_dqn_forward.1} parent=1 // pred_check_branch
      %90 = sbr.rel (0) target = $region45
    $region44: #{dueling_dqn_forward.1} parent=1 // pred_region
      _
    $region45: #{dueling_dqn_forward.1} parent=1 // pred_fallthru
      _
    // Predicated region
    $region46: #{dueling_dqn_forward.1} parent=1 // pred_check
      _
    $region47: #{dueling_dqn_forward.1} parent=1 // pred_check_branch
      %92 = sbr.rel (0) target = $region49
    $region48: #{dueling_dqn_forward.1} parent=1 // pred_region
      %93 = dma.done [#allocation3], 2048
    $region49: #{dueling_dqn_forward.1} parent=1 // pred_fallthru
      _
    // Predicated region
    $region50: #{dueling_dqn_forward.1} parent=1 // pred_check
      _
    $region51: #{dueling_dqn_forward.1} parent=1 // pred_check_branch
      %95 = sbr.rel (0) target = $region53
    $region52: #{dueling_dqn_forward.1} parent=1 // pred_region
      %96 = dma.done [#allocation5], 2048
    $region53: #{dueling_dqn_forward.1} parent=1 // pred_fallthru
      _
    // Predicated region
    $region54: #{dueling_dqn_forward.1} parent=1 // pred_check
      _
    $region55: #{dueling_dqn_forward.1} parent=1 // pred_check_branch
      %98 = sbr.rel (0) target = $region57
    $region56: #{dueling_dqn_forward.1} parent=1 // pred_region
      %99 = dma.done [#allocation5], 4096
    $region57: #{dueling_dqn_forward.1} parent=1 // pred_fallthru
      _
    // Predicated region
    $region58: #{dueling_dqn_forward.1} parent=1 // pred_check
      _
    $region59: #{dueling_dqn_forward.1} parent=1 // pred_check_branch
      %101 = sbr.rel (0) target = $region61
    $region60: #{dueling_dqn_forward.1} parent=1 // pred_region
      %102 = dma.done [#allocation8], 2048
    $region61: #{dueling_dqn_forward.1} parent=1 // pred_fallthru
      _
    // Predicated region
    $region62: #{dueling_dqn_forward.1} parent=1 // pred_check
      _
    $region63: #{dueling_dqn_forward.1} parent=1 // pred_check_branch
      %104 = sbr.rel (0) target = $region65
    $region64: #{dueling_dqn_forward.1} parent=1 // pred_region
      %105 = dma.done [#allocation8], 2048
    $region65: #{dueling_dqn_forward.1} parent=1 // pred_fallthru
      _
    %v106 = vld [vmem:[%s0] sm:$0xff]
    %v107 = vld [vmem:[#allocation2] sm:$0xff]
    %v108 = vld [vmem:[#allocation2 + $0x8] sm:$0xff]
    %v109 = vld [vmem:[#allocation2 + $0x10] sm:$0xff]
    %v110 = vld [vmem:[#allocation2 + $0x18] sm:$0xff]
    %v111 = vld [vmem:[#allocation2 + $0x20] sm:$0xff]
    %v112 = vld [vmem:[#allocation2 + $0x28] sm:$0xff]
    %v113 = vld [vmem:[#allocation2 + $0x30] sm:$0xff]
    %v114 = vld [vmem:[#allocation2 + $0x38] sm:$0xff]
    %v115 = vld [vmem:[#allocation2 + $0x40] sm:$0xff]
    %v116 = vld [vmem:[#allocation2 + $0x48] sm:$0xff]
    %v117 = vld [vmem:[#allocation2 + $0x50] sm:$0xff]
    %v118 = vld [vmem:[#allocation2 + $0x58] sm:$0xff]
    %v119 = vld [vmem:[#allocation2 + $0x60] sm:$0xff]
    %v120 = vld [vmem:[#allocation2 + $0x68] sm:$0xff]
    %v121 = vld [vmem:[#allocation2 + $0x70] sm:$0xff]
    %v122 = vld [vmem:[#allocation2 + $0x78] sm:$0xff]
    %v123 = vld [vmem:[%s2] sm:$0x1]
    %v125 = vlaneseq
    %v126 = vshrl.u32 %v125, 7
    %v127 = vsub.s32 0, %v126
    %v128 = vrot.slane %v123, %v127
    %130 = vmatprep.subr.mxu0 0.0
    %131 = vmatpush1.msra.mxu0 %v107
    %132 = vmatprep.subr.mxu0 0.0
    %133 = vmatpush1.msra.mxu0 %v108
    %134 = vmatprep.subr.mxu0 0.0
    %135 = vmatpush1.msra.mxu0 %v109
    %136 = vmatprep.subr.mxu0 0.0
    %137 = vmatpush1.msra.mxu0 %v110
    %138 = vmatprep.subr.mxu0 0.0
    %139 = vmatpush1.msra.mxu0 %v111
    %140 = vmatprep.subr.mxu0 0.0
    %141 = vmatpush1.msra.mxu0 %v112
    %142 = vmatprep.subr.mxu0 0.0
    %143 = vmatpush1.msra.mxu0 %v113
    %144 = vmatprep.subr.mxu0 0.0
    %145 = vmatpush1.msra.mxu0 %v114
    %146 = vmatprep.subr.mxu0 0.0
    %147 = vmatpush1.msra.mxu0 %v115
    %148 = vmatprep.subr.mxu0 0.0
    %149 = vmatpush1.msra.mxu0 %v116
    %150 = vmatprep.subr.mxu0 0.0
    %151 = vmatpush1.msra.mxu0 %v117
    %152 = vmatprep.subr.mxu0 0.0
    %153 = vmatpush1.msra.mxu0 %v118
    %154 = vmatprep.subr.mxu0 0.0
    %155 = vmatpush1.msra.mxu0 %v119
    %156 = vmatprep.subr.mxu0 0.0
    %157 = vmatpush1.msra.mxu0 %v120
    %158 = vmatprep.subr.mxu0 0.0
    %159 = vmatpush1.msra.mxu0 %v121
    %160 = vmatprep.subr.mxu0 0.0
    %161 = vmatpush1.msra.mxu0 %v122
    %162 = vmatprep.subr.mxu0 0.0
    %163 = vmatpush1.msra.mxu0 0.0
    %164 = vmatprep.subr.mxu0 0.0
    %165 = vmatpush1.msra.mxu0 0.0
    %166 = vmatprep.subr.mxu0 0.0
    %167 = vmatpush1.msra.mxu0 0.0
    %168 = vmatprep.subr.mxu0 0.0
    %169 = vmatpush1.msra.mxu0 0.0
    %170 = vmatprep.subr.mxu0 0.0
    %171 = vmatpush1.msra.mxu0 0.0
    %172 = vmatprep.subr.mxu0 0.0
    %173 = vmatpush1.msra.mxu0 0.0
    %174 = vmatprep.subr.mxu0 0.0
    %175 = vmatpush1.msra.mxu0 0.0
    %176 = vmatprep.subr.mxu0 0.0
    %177 = vmatpush1.msra.mxu0 0.0
    %178 = vmatprep.subr.mxu0 0.0
    %179 = vmatpush1.msra.mxu0 0.0
    %180 = vmatprep.subr.mxu0 0.0
    %181 = vmatpush1.msra.mxu0 0.0
    %182 = vmatprep.subr.mxu0 0.0
    %183 = vmatpush1.msra.mxu0 0.0
    %184 = vmatprep.subr.mxu0 0.0
    %185 = vmatpush1.msra.mxu0 0.0
    %186 = vmatprep.subr.mxu0 0.0
    %187 = vmatpush1.msra.mxu0 0.0
    %188 = vmatprep.subr.mxu0 0.0
    %189 = vmatpush1.msra.mxu0 0.0
    %190 = vmatprep.subr.mxu0 0.0
    %191 = vmatpush1.msra.mxu0 0.0
    %192 = vmatprep.subr.mxu0 0.0
    %193 = vmatpush1.msra.mxu0 0.0
    %194 = vmatprep.mubr.f32.mxu0 0.0
    %195 = vmatmul.mubr.f32.gmra.mrb[0].mxu0 %v106
    %v196 = vpop.f32.mrb[0].mxu0
    %v197 = vadd.f32 %v128, %v196
    %v198 = vpop.f32.mrb[0].mxu0
    %199 = vdwg.mxu0
    %v200 = vmax.f32 %v197, 0.0
    %v201 = vld [vmem:[#allocation4] sm:$0xff]
    %v202 = vld [vmem:[#allocation4 + $0x8] sm:$0xff]
    %v203 = vld [vmem:[#allocation4 + $0x10] sm:$0xff]
    %v204 = vld [vmem:[#allocation4 + $0x18] sm:$0xff]
    %v205 = vld [vmem:[#allocation4 + $0x20] sm:$0xff]
    %v206 = vld [vmem:[#allocation4 + $0x28] sm:$0xff]
    %v207 = vld [vmem:[#allocation4 + $0x30] sm:$0xff]
    %v208 = vld [vmem:[#allocation4 + $0x38] sm:$0xff]
    %v209 = vld [vmem:[#allocation4 + $0x40] sm:$0xff]
    %v210 = vld [vmem:[#allocation4 + $0x48] sm:$0xff]
    %v211 = vld [vmem:[#allocation4 + $0x50] sm:$0xff]
    %v212 = vld [vmem:[#allocation4 + $0x58] sm:$0xff]
    %v213 = vld [vmem:[#allocation4 + $0x60] sm:$0xff]
    %v214 = vld [vmem:[#allocation4 + $0x68] sm:$0xff]
    %v215 = vld [vmem:[#allocation4 + $0x70] sm:$0xff]
    %v216 = vld [vmem:[#allocation4 + $0x78] sm:$0xff]
    %v217 = vld [vmem:[%s4] sm:$0x1]
    %v219 = vlaneseq
    %v220 = vshrl.u32 %v219, 7
    %v221 = vsub.s32 0, %v220
    %v222 = vrot.slane %v217, %v221
    %224 = vmatprep.subr.mxu0 0.0
    %225 = vmatpush1.msra.mxu0 %v201
    %226 = vmatprep.subr.mxu0 0.0
    %227 = vmatpush1.msra.mxu0 %v202
    %228 = vmatprep.subr.mxu0 0.0
    %229 = vmatpush1.msra.mxu0 %v203
    %230 = vmatprep.subr.mxu0 0.0
    %231 = vmatpush1.msra.mxu0 %v204
    %232 = vmatprep.subr.mxu0 0.0
    %233 = vmatpush1.msra.mxu0 %v205
    %234 = vmatprep.subr.mxu0 0.0
    %235 = vmatpush1.msra.mxu0 %v206
    %236 = vmatprep.subr.mxu0 0.0
    %237 = vmatpush1.msra.mxu0 %v207
    %238 = vmatprep.subr.mxu0 0.0
    %239 = vmatpush1.msra.mxu0 %v208
    %240 = vmatprep.subr.mxu0 0.0
    %241 = vmatpush1.msra.mxu0 %v209
    %242 = vmatprep.subr.mxu0 0.0
    %243 = vmatpush1.msra.mxu0 %v210
    %244 = vmatprep.subr.mxu0 0.0
    %245 = vmatpush1.msra.mxu0 %v211
    %246 = vmatprep.subr.mxu0 0.0
    %247 = vmatpush1.msra.mxu0 %v212
    %248 = vmatprep.subr.mxu0 0.0
    %249 = vmatpush1.msra.mxu0 %v213
    %250 = vmatprep.subr.mxu0 0.0
    %251 = vmatpush1.msra.mxu0 %v214
    %252 = vmatprep.subr.mxu0 0.0
    %253 = vmatpush1.msra.mxu0 %v215
    %254 = vmatprep.subr.mxu0 0.0
    %255 = vmatpush1.msra.mxu0 %v216
    %256 = vmatprep.subr.mxu0 0.0
    %257 = vmatpush1.msra.mxu0 0.0
    %258 = vmatprep.subr.mxu0 0.0
    %259 = vmatpush1.msra.mxu0 0.0
    %260 = vmatprep.subr.mxu0 0.0
    %261 = vmatpush1.msra.mxu0 0.0
    %262 = vmatprep.subr.mxu0 0.0
    %263 = vmatpush1.msra.mxu0 0.0
    %264 = vmatprep.subr.mxu0 0.0
    %265 = vmatpush1.msra.mxu0 0.0
    %266 = vmatprep.subr.mxu0 0.0
    %267 = vmatpush1.msra.mxu0 0.0
    %268 = vmatprep.subr.mxu0 0.0
    %269 = vmatpush1.msra.mxu0 0.0
    %270 = vmatprep.subr.mxu0 0.0
    %271 = vmatpush1.msra.mxu0 0.0
    %272 = vmatprep.subr.mxu0 0.0
    %273 = vmatpush1.msra.mxu0 0.0
    %274 = vmatprep.subr.mxu0 0.0
    %275 = vmatpush1.msra.mxu0 0.0
    %276 = vmatprep.subr.mxu0 0.0
    %277 = vmatpush1.msra.mxu0 0.0
    %278 = vmatprep.subr.mxu0 0.0
    %279 = vmatpush1.msra.mxu0 0.0
    %280 = vmatprep.subr.mxu0 0.0
    %281 = vmatpush1.msra.mxu0 0.0
    %282 = vmatprep.subr.mxu0 0.0
    %283 = vmatpush1.msra.mxu0 0.0
    %284 = vmatprep.subr.mxu0 0.0
    %285 = vmatpush1.msra.mxu0 0.0
    %286 = vmatprep.subr.mxu0 0.0
    %287 = vmatpush1.msra.mxu0 0.0
    %288 = vmatprep.mubr.f32.mxu0 0.0
    %289 = vmatmul.mubr.f32.gmra.mrb[0].mxu0 %v200
    %v290 = vpop.f32.mrb[0].mxu0
    %v291 = vadd.f32 %v222, %v290
    %v292 = vpop.f32.mrb[0].mxu0
    %293 = vdwg.mxu0
    %v294 = vmax.f32 %v291, 0.0
    %v295 = vld [vmem:[#allocation6] sm:$0xff]
    %v296 = vld [vmem:[#allocation6 + $0x8] sm:$0xff]
    %v297 = vld [vmem:[#allocation6 + $0x10] sm:$0xff]
    %v298 = vld [vmem:[#allocation6 + $0x18] sm:$0xff]
    %v299 = vld [vmem:[#allocation6 + $0x20] sm:$0xff]
    %v300 = vld [vmem:[#allocation6 + $0x28] sm:$0xff]
    %v301 = vld [vmem:[#allocation6 + $0x30] sm:$0xff]
    %v302 = vld [vmem:[#allocation6 + $0x38] sm:$0xff]
    %v303 = vld [vmem:[#allocation6 + $0x40] sm:$0xff]
    %v304 = vld [vmem:[#allocation6 + $0x48] sm:$0xff]
    %v305 = vld [vmem:[#allocation6 + $0x50] sm:$0xff]
    %v306 = vld [vmem:[#allocation6 + $0x58] sm:$0xff]
    %v307 = vld [vmem:[#allocation6 + $0x60] sm:$0xff]
    %v308 = vld [vmem:[#allocation6 + $0x68] sm:$0xff]
    %v309 = vld [vmem:[#allocation6 + $0x70] sm:$0xff]
    %v310 = vld [vmem:[#allocation6 + $0x78] sm:$0xff]
    %v311 = vld [vmem:[#allocation6 + $0x80] sm:$0xff]
    %v312 = vld [vmem:[#allocation6 + $0x88] sm:$0xff]
    %v313 = vld [vmem:[#allocation6 + $0x90] sm:$0xff]
    %v314 = vld [vmem:[#allocation6 + $0x98] sm:$0xff]
    %v315 = vld [vmem:[#allocation6 + $0xa0] sm:$0xff]
    %v316 = vld [vmem:[#allocation6 + $0xa8] sm:$0xff]
    %v317 = vld [vmem:[#allocation6 + $0xb0] sm:$0xff]
    %v318 = vld [vmem:[#allocation6 + $0xb8] sm:$0xff]
    %v319 = vld [vmem:[#allocation6 + $0xc0] sm:$0xff]
    %v320 = vld [vmem:[#allocation6 + $0xc8] sm:$0xff]
    %v321 = vld [vmem:[#allocation6 + $0xd0] sm:$0xff]
    %v322 = vld [vmem:[#allocation6 + $0xd8] sm:$0xff]
    %v323 = vld [vmem:[#allocation6 + $0xe0] sm:$0xff]
    %v324 = vld [vmem:[#allocation6 + $0xe8] sm:$0xff]
    %v325 = vld [vmem:[#allocation6 + $0xf0] sm:$0xff]
    %v326 = vld [vmem:[#allocation6 + $0xf8] sm:$0xff]
    %v327 = vld [vmem:[%s6] sm:$0x3]
    %v329 = vlaneseq
    %v330 = vshrl.u32 %v329, 7
    %v331 = vsub.s32 0, %v330
    %v332 = vrot.slane %v327, %v331
    %v333 = vlaneseq
    %v334 = vshrl.u32 %v333, 7
    %v335 = vsub.s32 1, %v334
    %v336 = vrot.slane %v327, %v335
    %339 = vmatprep.subr.mxu0 %v296
    %340 = vmatpush1.msra.mxu0 %v295
    %341 = vmatprep.subr.mxu0 %v298
    %342 = vmatpush1.msra.mxu0 %v297
    %343 = vmatprep.subr.mxu0 %v300
    %344 = vmatpush1.msra.mxu0 %v299
    %345 = vmatprep.subr.mxu0 %v302
    %346 = vmatpush1.msra.mxu0 %v301
    %347 = vmatprep.subr.mxu0 %v304
    %348 = vmatpush1.msra.mxu0 %v303
    %349 = vmatprep.subr.mxu0 %v306
    %350 = vmatpush1.msra.mxu0 %v305
    %351 = vmatprep.subr.mxu0 %v308
    %352 = vmatpush1.msra.mxu0 %v307
    %353 = vmatprep.subr.mxu0 %v310
    %354 = vmatpush1.msra.mxu0 %v309
    %355 = vmatprep.subr.mxu0 %v312
    %356 = vmatpush1.msra.mxu0 %v311
    %357 = vmatprep.subr.mxu0 %v314
    %358 = vmatpush1.msra.mxu0 %v313
    %359 = vmatprep.subr.mxu0 %v316
    %360 = vmatpush1.msra.mxu0 %v315
    %361 = vmatprep.subr.mxu0 %v318
    %362 = vmatpush1.msra.mxu0 %v317
    %363 = vmatprep.subr.mxu0 %v320
    %364 = vmatpush1.msra.mxu0 %v319
    %365 = vmatprep.subr.mxu0 %v322
    %366 = vmatpush1.msra.mxu0 %v321
    %367 = vmatprep.subr.mxu0 %v324
    %368 = vmatpush1.msra.mxu0 %v323
    %369 = vmatprep.subr.mxu0 %v326
    %370 = vmatpush1.msra.mxu0 %v325
    %371 = vmatprep.subr.mxu0 0.0
    %372 = vmatpush1.msra.mxu0 0.0
    %373 = vmatprep.subr.mxu0 0.0
    %374 = vmatpush1.msra.mxu0 0.0
    %375 = vmatprep.subr.mxu0 0.0
    %376 = vmatpush1.msra.mxu0 0.0
    %377 = vmatprep.subr.mxu0 0.0
    %378 = vmatpush1.msra.mxu0 0.0
    %379 = vmatprep.subr.mxu0 0.0
    %380 = vmatpush1.msra.mxu0 0.0
    %381 = vmatprep.subr.mxu0 0.0
    %382 = vmatpush1.msra.mxu0 0.0
    %383 = vmatprep.subr.mxu0 0.0
    %384 = vmatpush1.msra.mxu0 0.0
    %385 = vmatprep.subr.mxu0 0.0
    %386 = vmatpush1.msra.mxu0 0.0
    %387 = vmatprep.subr.mxu0 0.0
    %388 = vmatpush1.msra.mxu0 0.0
    %389 = vmatprep.subr.mxu0 0.0
    %390 = vmatpush1.msra.mxu0 0.0
    %391 = vmatprep.subr.mxu0 0.0
    %392 = vmatpush1.msra.mxu0 0.0
    %393 = vmatprep.subr.mxu0 0.0
    %394 = vmatpush1.msra.mxu0 0.0
    %395 = vmatprep.subr.mxu0 0.0
    %396 = vmatpush1.msra.mxu0 0.0
    %397 = vmatprep.subr.mxu0 0.0
    %398 = vmatpush1.msra.mxu0 0.0
    %399 = vmatprep.subr.mxu0 0.0
    %400 = vmatpush1.msra.mxu0 0.0
    %401 = vmatprep.subr.mxu0 0.0
    %402 = vmatpush1.msra.mxu0 0.0
    %403 = vmatprep.mubr.f32.mxu0 0.0
    %404 = vmatmul.mubr.f32.gmra.mrb[0].mxu0 %v294
    %v405 = vpop.f32.mrb[0].mxu0
    %v406 = vadd.f32 %v332, %v405
    %v407 = vpop.f32.mrb[0].mxu0
    %v408 = vadd.f32 %v336, %v407
    %409 = vdwg.mxu0
    %v410 = vmax.f32 %v406, 0.0
    %v411 = vmax.f32 %v408, 0.0
    %v412 = vld [vmem:[#allocation7] sm:$0xff]
    %v413 = vld [vmem:[#allocation7 + $0x8] sm:$0xff]
    %v414 = vld [vmem:[#allocation7 + $0x10] sm:$0xff]
    %v415 = vld [vmem:[#allocation7 + $0x18] sm:$0xff]
    %v416 = vld [vmem:[#allocation7 + $0x20] sm:$0xff]
    %v417 = vld [vmem:[#allocation7 + $0x28] sm:$0xff]
    %v418 = vld [vmem:[#allocation7 + $0x30] sm:$0xff]
    %v419 = vld [vmem:[#allocation7 + $0x38] sm:$0xff]
    %v420 = vld [vmem:[#allocation7 + $0x40] sm:$0xff]
    %v421 = vld [vmem:[#allocation7 + $0x48] sm:$0xff]
    %v422 = vld [vmem:[#allocation7 + $0x50] sm:$0xff]
    %v423 = vld [vmem:[#allocation7 + $0x58] sm:$0xff]
    %v424 = vld [vmem:[#allocation7 + $0x60] sm:$0xff]
    %v425 = vld [vmem:[#allocation7 + $0x68] sm:$0xff]
    %v426 = vld [vmem:[#allocation7 + $0x70] sm:$0xff]
    %v427 = vld [vmem:[#allocation7 + $0x78] sm:$0xff]
    %v428 = vld [vmem:[%s8] sm:$0x1]
    %v430 = vlaneseq
    %v431 = vshrl.u32 %v430, 7
    %v432 = vsub.s32 0, %v431
    %v433 = vrot.slane %v428, %v432
    %435 = vmatprep.subr.mxu0 0.0
    %436 = vmatpush1.msra.mxu0 %v412
    %437 = vmatprep.subr.mxu0 0.0
    %438 = vmatpush1.msra.mxu0 %v413
    %439 = vmatprep.subr.mxu0 0.0
    %440 = vmatpush1.msra.mxu0 %v414
    %441 = vmatprep.subr.mxu0 0.0
    %442 = vmatpush1.msra.mxu0 %v415
    %443 = vmatprep.subr.mxu0 0.0
    %444 = vmatpush1.msra.mxu0 %v416
    %445 = vmatprep.subr.mxu0 0.0
    %446 = vmatpush1.msra.mxu0 %v417
    %447 = vmatprep.subr.mxu0 0.0
    %448 = vmatpush1.msra.mxu0 %v418
    %449 = vmatprep.subr.mxu0 0.0
    %450 = vmatpush1.msra.mxu0 %v419
    %451 = vmatprep.subr.mxu0 0.0
    %452 = vmatpush1.msra.mxu0 %v420
    %453 = vmatprep.subr.mxu0 0.0
    %454 = vmatpush1.msra.mxu0 %v421
    %455 = vmatprep.subr.mxu0 0.0
    %456 = vmatpush1.msra.mxu0 %v422
    %457 = vmatprep.subr.mxu0 0.0
    %458 = vmatpush1.msra.mxu0 %v423
    %459 = vmatprep.subr.mxu0 0.0
    %460 = vmatpush1.msra.mxu0 %v424
    %461 = vmatprep.subr.mxu0 0.0
    %462 = vmatpush1.msra.mxu0 %v425
    %463 = vmatprep.subr.mxu0 0.0
    %464 = vmatpush1.msra.mxu0 %v426
    %465 = vmatprep.subr.mxu0 0.0
    %466 = vmatpush1.msra.mxu0 %v427
    %467 = vmatprep.subr.mxu0 0.0
    %468 = vmatpush1.msra.mxu0 0.0
    %469 = vmatprep.subr.mxu0 0.0
    %470 = vmatpush1.msra.mxu0 0.0
    %471 = vmatprep.subr.mxu0 0.0
    %472 = vmatpush1.msra.mxu0 0.0
    %473 = vmatprep.subr.mxu0 0.0
    %474 = vmatpush1.msra.mxu0 0.0
    %475 = vmatprep.subr.mxu0 0.0
    %476 = vmatpush1.msra.mxu0 0.0
    %477 = vmatprep.subr.mxu0 0.0
    %478 = vmatpush1.msra.mxu0 0.0
    %479 = vmatprep.subr.mxu0 0.0
    %480 = vmatpush1.msra.mxu0 0.0
    %481 = vmatprep.subr.mxu0 0.0
    %482 = vmatpush1.msra.mxu0 0.0
    %483 = vmatprep.subr.mxu0 0.0
    %484 = vmatpush1.msra.mxu0 0.0
    %485 = vmatprep.subr.mxu0 0.0
    %486 = vmatpush1.msra.mxu0 0.0
    %487 = vmatprep.subr.mxu0 0.0
    %488 = vmatpush1.msra.mxu0 0.0
    %489 = vmatprep.subr.mxu0 0.0
    %490 = vmatpush1.msra.mxu0 0.0
    %491 = vmatprep.subr.mxu0 0.0
    %492 = vmatpush1.msra.mxu0 0.0
    %493 = vmatprep.subr.mxu0 0.0
    %494 = vmatpush1.msra.mxu0 0.0
    %495 = vmatprep.subr.mxu0 0.0
    %496 = vmatpush1.msra.mxu0 0.0
    %497 = vmatprep.subr.mxu0 0.0
    %498 = vmatpush1.msra.mxu0 0.0
    %499 = vmatprep.mubr.f32.mxu0 0.0
    %500 = vmatmul.mubr.f32.gmra.mrb[0].mxu0 %v410
    %v501 = vpop.f32.mrb[0].mxu0
    %v502 = vadd.f32 %v433, %v501
    %v503 = vpop.f32.mrb[0].mxu0
    %504 = vdwg.mxu0
    %v505 = vld [vmem:[#allocation9] sm:$0xff]
    %v506 = vld [vmem:[#allocation9 + $0x8] sm:$0xff]
    %v507 = vld [vmem:[#allocation9 + $0x10] sm:$0xff]
    %v508 = vld [vmem:[#allocation9 + $0x18] sm:$0xff]
    %v509 = vld [vmem:[#allocation9 + $0x20] sm:$0xff]
    %v510 = vld [vmem:[#allocation9 + $0x28] sm:$0xff]
    %v511 = vld [vmem:[#allocation9 + $0x30] sm:$0xff]
    %v512 = vld [vmem:[#allocation9 + $0x38] sm:$0xff]
    %v513 = vld [vmem:[#allocation9 + $0x40] sm:$0xff]
    %v514 = vld [vmem:[#allocation9 + $0x48] sm:$0xff]
    %v515 = vld [vmem:[#allocation9 + $0x50] sm:$0xff]
    %v516 = vld [vmem:[#allocation9 + $0x58] sm:$0xff]
    %v517 = vld [vmem:[#allocation9 + $0x60] sm:$0xff]
    %v518 = vld [vmem:[#allocation9 + $0x68] sm:$0xff]
    %v519 = vld [vmem:[#allocation9 + $0x70] sm:$0xff]
    %v520 = vld [vmem:[#allocation9 + $0x78] sm:$0xff]
    %v521 = vld [vmem:[%s10] sm:$0x1]
    %v523 = vlaneseq
    %v524 = vshrl.u32 %v523, 7
    %v525 = vsub.s32 0, %v524
    %v526 = vrot.slane %v521, %v525
    %528 = vmatprep.subr.mxu0 0.0
    %529 = vmatpush1.msra.mxu0 %v505
    %530 = vmatprep.subr.mxu0 0.0
    %531 = vmatpush1.msra.mxu0 %v506
    %532 = vmatprep.subr.mxu0 0.0
    %533 = vmatpush1.msra.mxu0 %v507
    %534 = vmatprep.subr.mxu0 0.0
    %535 = vmatpush1.msra.mxu0 %v508
    %536 = vmatprep.subr.mxu0 0.0
    %537 = vmatpush1.msra.mxu0 %v509
    %538 = vmatprep.subr.mxu0 0.0
    %539 = vmatpush1.msra.mxu0 %v510
    %540 = vmatprep.subr.mxu0 0.0
    %541 = vmatpush1.msra.mxu0 %v511
    %542 = vmatprep.subr.mxu0 0.0
    %543 = vmatpush1.msra.mxu0 %v512
    %544 = vmatprep.subr.mxu0 0.0
    %545 = vmatpush1.msra.mxu0 %v513
    %546 = vmatprep.subr.mxu0 0.0
    %547 = vmatpush1.msra.mxu0 %v514
    %548 = vmatprep.subr.mxu0 0.0
    %549 = vmatpush1.msra.mxu0 %v515
    %550 = vmatprep.subr.mxu0 0.0
    %551 = vmatpush1.msra.mxu0 %v516
    %552 = vmatprep.subr.mxu0 0.0
    %553 = vmatpush1.msra.mxu0 %v517
    %554 = vmatprep.subr.mxu0 0.0
    %555 = vmatpush1.msra.mxu0 %v518
    %556 = vmatprep.subr.mxu0 0.0
    %557 = vmatpush1.msra.mxu0 %v519
    %558 = vmatprep.subr.mxu0 0.0
    %559 = vmatpush1.msra.mxu0 %v520
    %560 = vmatprep.subr.mxu0 0.0
    %561 = vmatpush1.msra.mxu0 0.0
    %562 = vmatprep.subr.mxu0 0.0
    %563 = vmatpush1.msra.mxu0 0.0
    %564 = vmatprep.subr.mxu0 0.0
    %565 = vmatpush1.msra.mxu0 0.0
    %566 = vmatprep.subr.mxu0 0.0
    %567 = vmatpush1.msra.mxu0 0.0
    %568 = vmatprep.subr.mxu0 0.0
    %569 = vmatpush1.msra.mxu0 0.0
    %570 = vmatprep.subr.mxu0 0.0
    %571 = vmatpush1.msra.mxu0 0.0
    %572 = vmatprep.subr.mxu0 0.0
    %573 = vmatpush1.msra.mxu0 0.0
    %574 = vmatprep.subr.mxu0 0.0
    %575 = vmatpush1.msra.mxu0 0.0
    %576 = vmatprep.subr.mxu0 0.0
    %577 = vmatpush1.msra.mxu0 0.0
    %578 = vmatprep.subr.mxu0 0.0
    %579 = vmatpush1.msra.mxu0 0.0
    %580 = vmatprep.subr.mxu0 0.0
    %581 = vmatpush1.msra.mxu0 0.0
    %582 = vmatprep.subr.mxu0 0.0
    %583 = vmatpush1.msra.mxu0 0.0
    %584 = vmatprep.subr.mxu0 0.0
    %585 = vmatpush1.msra.mxu0 0.0
    %586 = vmatprep.subr.mxu0 0.0
    %587 = vmatpush1.msra.mxu0 0.0
    %588 = vmatprep.subr.mxu0 0.0
    %589 = vmatpush1.msra.mxu0 0.0
    %590 = vmatprep.subr.mxu0 0.0
    %591 = vmatpush1.msra.mxu0 0.0
    %592 = vmatprep.mubr.f32.mxu0 0.0
    %593 = vmatmul.mubr.f32.gmra.mrb[0].mxu0 %v411
    %v594 = vpop.f32.mrb[0].mxu0
    %v595 = vadd.f32 %v526, %v594
    %v596 = vpop.f32.mrb[0].mxu0
    %597 = vdwg.mxu0
    %v598 = vlaneseq
    %v599 = vshrl.u32 %v598, 7
    %v600 = vlaneseq
    %v601 = vand.u32 %v600, 127
    %vm602 = vcmp.lt.s32.totalorder %v599, 2
    %vm603 = vcmp.lt.s32.totalorder %v601, 8
    %vm604 = vmand %vm602, %vm603
    %v605 = vsel %vm604, %v595, 0.0
    %606 = vadd.xlane.f32.xlu0 %v605
    %v607 = vpop.xlane.xlu0 %606
    %v608 = vrot.slane %v607, 4
    %v609 = vadd.f32 %v607, %v608
    %v610 = vrot.slane %v609, 2
    %v611 = vadd.f32 %v609, %v610
    %v612 = vrot.slane %v611, 1
    %v613 = vadd.f32 %v611, %v612
    %s614 = vtos %v613
    %s615 = smul.f32 %s614, 0.0625
    %v616 = vstv %s615
    %v617 = vsub.f32 %v595, %v616
    %v618 = vadd.f32 %v502, %v617
    %619 = vst [vmem:[%s11] sm:$0xff] %v618
    // Predicated region
    $region66: #{dueling_dqn_forward.1} parent=1 // pred_check
      _
    $region67: #{dueling_dqn_forward.1} parent=1 // pred_check_branch
      %621 = sbr.rel (0) target = $region69
    $region68: #{dueling_dqn_forward.1} parent=1 // pred_region
      _
    $region69: #{dueling_dqn_forward.1} parent=1 // pred_fallthru
      _
    // Predicated region
    $region70: #{dueling_dqn_forward.1} parent=1 // pred_check
      _
    $region71: #{dueling_dqn_forward.1} parent=1 // pred_check_branch
      %623 = sbr.rel (0) target = $region73
    $region72: #{dueling_dqn_forward.1} parent=1 // pred_region
      _
    $region73: #{dueling_dqn_forward.1} parent=1 // pred_fallthru
      _
    %624 = vsyncpa [#allocation3], 1
    %625 = vsyncpa [#allocation5], 1
    %626 = vsyncpa [#allocation8], 1

</llo_original>
